<compile_context>
chip_gen: v7x
topology: tpu7x:2x2x1
jax: 0.10.0
libtpu: 0.0.40
codegen_flags: <defaults>
</compile_context>

<pallas_src>
import math
from functools import partial

import numpy as np
import jax
import jax.numpy as jnp
from jax.experimental import pallas as pl
from jax.experimental.pallas import tpu as pltpu

NEG = -9e15   # plain Python float (NOT a jnp constant -> avoids kernel const capture)


def _elu(v):
    return jnp.where(v > 0, v, jnp.exp(v) - 1.0)


# ----------------------------------------------------------------------------
# Fused kernel: one (batch, row-tile) step.
#   Step 1: GATv2 node attention (adj-masked, softmax over neighbors j) + h_prime.
#   Step 2: (i, j, f) external dot attention as F lane-dense (TI, N) slabs + ext_rep.
# ----------------------------------------------------------------------------
def _gat_fused_kernel(scal_ref, xc_ref, xr_ref, sc_ref, sr_ref, adj_ref,
                      ext_ref, extT_ref, w_ref, wv_ref,
                      hp_ref, er_ref, *, alpha, concat):
    x_c = xc_ref[0]          # (TI, 1)  x_i  (rows of this tile)
    x_r = xr_ref[0]          # (1,  N)  x_j  (all neighbors)
    s_c = sc_ref[0]          # (TI, 1)  side_i
    s_r = sr_ref[0]          # (1,  N)  side_j
    adj = adj_ref[...]       # (TI, N)
    ext = ext_ref[0]         # (TI, F)  ext_i
    extT = extT_ref[0]       # (F,  N)  ext_j (transposed host-side; no in-kernel XLU transpose)
    w = w_ref[...]           # (1, E)
    wv = wv_ref[...]         # (1, E)
    F = ext.shape[-1]

    c1, c2 = scal_ref[0], scal_ref[1]        # W.a[:E], W.a[E:]
    cs1, cs2 = scal_ref[2], scal_ref[3]      # WS.aS[:E], WS.aS[E:]
    a00, a01 = scal_ref[4], scal_ref[5]      # A = WQ @ WK.T / sqrt(att_dim)
    a10, a11 = scal_ref[6], scal_ref[7]

    aa = alpha * alpha       # leaky(leaky(v)) == where(v > 0, v, alpha^2 * v)

    # ---- Step 1: GATv2 node attention -------------------------------------
    e_raw = c1 * x_c + c2 * x_r                               # (TI, N)
    e = jnp.where(e_raw > 0, e_raw, aa * e_raw)
    t_raw = cs1 * s_c + cs2 * s_r
    es = jnp.where(t_raw > 0, t_raw, aa * t_raw)

    mask = adj > 0.0                                          # computed once
    att = jnp.where(mask, e + es, 2.0 * NEG)
    att = jnp.where(att > 0, att, NEG)
    # softmax over neighbors j (lane axis)
    att = jnp.exp(att - jnp.max(att, axis=-1, keepdims=True))
    att = att * (1.0 / jnp.sum(att, axis=-1, keepdims=True))  # one (TI,1) divide, broadcast-mul

    # h_prime[i, e] = (sum_j att[i, j] * x[j]) * W[0, e]
    agg = jnp.sum(att * x_r, axis=-1, keepdims=True)          # (TI, 1)
    hp = agg * w                                              # (TI, E)
    hp_ref[0] = _elu(hp) if concat else hp

    # ---- Step 2: external-feature dot attention (softmax over F) ----------
    u = a00 * x_c + a10 * x_r                                 # (TI, N)
    v = a01 * x_c + a11 * x_r                                 # (TI, N)

    slabs = []
    m = None
    for f in range(F):                                        # F is small & static -> unrolled
        ei_f = ext[:, f:f + 1]                                # (TI, 1)  ext_i[f]
        ej_f = extT[f:f + 1, :]                               # (1,  N)  ext_j[f]
        d = u * ei_f + v * ej_f                               # (TI, N)  lane-dense slab
        d = jnp.where(d > 0, d, NEG)
        slabs.append(d)
        m = d if m is None else jnp.maximum(m, d)

    denom = jnp.zeros_like(m)
    acc = jnp.zeros_like(m)
    for f in range(F):
        p = jnp.exp(slabs[f] - m)
        denom = denom + p
        acc = acc + p * ext[:, f:f + 1]

    # ext_rep[i, e] = (sum_j att[i,j] * sum_f softmax_f(dot)[i,j,f] * ext[i,f]) * WV[0,e]
    s = jnp.sum(att * acc / denom, axis=-1, keepdims=True)    # (TI, 1)
    er = s * wv                                               # (TI, E)
    er_ref[0] = _elu(er) if concat else er


# ----------------------------------------------------------------------------
# Wrapper
# ----------------------------------------------------------------------------
def _pick_row_tile(n):
    for t in (512, 256, 128):
        if n % t == 0:
            return t
    return n


def graph_attention_forward(x, adj, ext, side, params, *, alpha=0.2, concat=True):
    bs, N = x.shape
    F_ = ext.shape[-1]
    E = params['W'].shape[1]
    D = params['WQ'].shape[1]

    x = x.astype(jnp.float32)
    side = side.astype(jnp.float32)
    ext = ext.astype(jnp.float32)
    adj = adj.astype(jnp.float32)

    # fold the degenerate width-1 parameter contractions host-side (in_cfeatures == 1)
    w_row = params['W'].reshape(E).astype(jnp.float32)
    ws_row = params['WS'].reshape(E).astype(jnp.float32)
    c1 = jnp.dot(w_row, params['a'][:E, 0])
    c2 = jnp.dot(w_row, params['a'][E:, 0])
    cs1 = jnp.dot(ws_row, params['aS'][:E, 0])
    cs2 = jnp.dot(ws_row, params['aS'][E:, 0])
    A = (params['WQ'] @ params['WK'].T) / math.sqrt(D)        # (2, 2) scalar table
    scal = jnp.stack([c1, c2, cs1, cs2,
                      A[0, 0], A[0, 1], A[1, 0], A[1, 1]]).astype(jnp.float32)

    w = params['W'].reshape(1, E).astype(jnp.float32)
    wv = params['WV'].reshape(1, E).astype(jnp.float32)

    # host-side layout plumbing only (keeps the kernel transpose-free & lane-dense)
    x_col = x.reshape(bs, N, 1)
    x_row = x.reshape(bs, 1, N)
    s_col = side.reshape(bs, N, 1)
    s_row = side.reshape(bs, 1, N)
    extT = jnp.transpose(ext, (0, 2, 1))                      # (bs, F, N)

    TI = _pick_row_tile(N)
    grid = (bs, N // TI)

    smem_spec = pl.BlockSpec((8,), lambda b, i: (0,),
                             memory_space=pltpu.MemorySpace.SMEM)

    h_prime, ext_rep = pl.pallas_call(
        partial(_gat_fused_kernel, alpha=float(alpha), concat=bool(concat)),
        grid=grid,
        in_specs=[
            smem_spec,                                              # folded scalars
            pl.BlockSpec((1, TI, 1), lambda b, i: (b, i, 0)),       # x_i   (column)
            pl.BlockSpec((1, 1, N), lambda b, i: (b, 0, 0)),        # x_j   (row)
            pl.BlockSpec((1, TI, 1), lambda b, i: (b, i, 0)),       # side_i
            pl.BlockSpec((1, 1, N), lambda b, i: (b, 0, 0)),        # side_j
            pl.BlockSpec((TI, N), lambda b, i: (i, 0)),             # adj (shared over batch)
            pl.BlockSpec((1, TI, F_), lambda b, i: (b, i, 0)),      # ext_i
            pl.BlockSpec((1, F_, N), lambda b, i: (b, 0, 0)),       # ext_j (transposed)
            pl.BlockSpec((1, E), lambda b, i: (0, 0)),              # W
            pl.BlockSpec((1, E), lambda b, i: (0, 0)),              # WV
        ],
        out_specs=[
            pl.BlockSpec((1, TI, E), lambda b, i: (b, i, 0)),       # h_prime
            pl.BlockSpec((1, TI, E), lambda b, i: (b, i, 0)),       # ext_rep
        ],
        out_shape=[
            jax.ShapeDtypeStruct((bs, N, E), jnp.float32),
            jax.ShapeDtypeStruct((bs, N, E), jnp.float32),
        ],
        compiler_params=pltpu.CompilerParams(
            dimension_semantics=("parallel", "parallel")),
    )(scal, x_col, x_row, s_col, s_row, adj, ext, extT, w, wv)

    return h_prime, ext_rep


# ----------------------------------------------------------------------------
# Deterministic parameter init (xavier_uniform, gain=1.414, like the module)
# ----------------------------------------------------------------------------
def _xavier(key, shape, gain=1.414):
    fan_in, fan_out = shape
    bound = gain * math.sqrt(6.0 / (fan_in + fan_out))
    return jax.random.uniform(key, shape, jnp.float32, -bound, bound)


def init_params(key, in_cfeatures, in_xfeatures, out_features, att_dim):
    ks = jax.random.split(key, 7)
    return dict(
        W=_xavier(ks[0], (in_cfeatures, out_features)),
        WS=_xavier(ks[1], (in_cfeatures, out_features)),
        a=_xavier(ks[2], (2 * out_features, 1)),
        aS=_xavier(ks[3], (2 * out_features, 1)),
        WQ=_xavier(ks[4], (2, att_dim)),
        WK=_xavier(ks[5], (2, att_dim)),
        WV=_xavier(ks[6], (1, out_features)),
    )


# ----------------------------------------------------------------------------
# Pure-JAX reference mirroring the torch forward (eval mode), for verification.
# ----------------------------------------------------------------------------
def _reference_forward(x, adj, ext, side, params, *, alpha, concat):
    bs, N = x.shape
    F_ = ext.shape[-1]
    E = params['W'].shape[1]
    D = params['WQ'].shape[1]
    zero = jnp.float32(-9e15)
    leaky = lambda v: jnp.where(v > 0, v, alpha * v)

    inp = x.reshape(bs, N, 1)
    sd = side.reshape(bs, N, 1)
    ex = ext.reshape(bs, N, F_)
    adjb = jnp.broadcast_to(adj, (bs, N, N))

    h = inp @ params['W']
    a1, a2 = params['a'][:E, 0], params['a'][E:, 0]
    e = leaky(leaky((h @ a1)[:, :, None] + (h @ a2)[:, None, :]))
    att = jnp.where(adjb > 0, e, zero)
    hs = sd @ params['WS']
    as1, as2 = params['aS'][:E, 0], params['aS'][E:, 0]
    es = leaky(leaky((hs @ as1)[:, :, None] + (hs @ as2)[:, None, :]))
    att = att + jnp.where(adjb > 0, es, zero)
    att = jnp.where(att > 0, att, zero)
    att = jax.nn.softmax(att, axis=2)
    h_prime = att @ h

    q = jnp.concatenate([jnp.broadcast_to(inp[:, :, None, :], (bs, N, N, 1)),
                         jnp.broadcast_to(inp[:, None, :, :], (bs, N, N, 1))], axis=-1)
    q = (q @ params['WQ']) / math.sqrt(D)
    k = jnp.concatenate([jnp.broadcast_to(ex[:, :, None, :, None], (bs, N, N, F_, 1)),
                         jnp.broadcast_to(ex[:, None, :, :, None], (bs, N, N, F_, 1))], axis=-1)
    k = k @ params['WK']
    dot = jnp.einsum('bijd,bijfd->bijf', q, k)
    dot = jnp.where(dot > 0, dot, zero)
    dot = jax.nn.softmax(dot, axis=3)
    v = ex[..., None] @ params['WV']
    final = dot * att[:, :, :, None]
    ext_rep = jnp.einsum('bijf,bife->bie', final, v)
    if concat:
        return jax.nn.elu(h_prime), jax.nn.elu(ext_rep)
    return h_prime, ext_rep


if __name__ == "__main__":
    key = jax.random.PRNGKey(0)
    bs, N, F_, E, D = 2, 8, 4, 8, 4
    in_cfeatures = 1   # required by the reference forward: matmul(input.view(bs,-1,1), W)
    alpha = 0.2

    k1, k2, k3, k4, k5 = jax.random.split(key, 5)
    x = jax.random.normal(k1, (bs, N), jnp.float32)          # "input"
    side = jax.random.normal(k2, (bs, N), jnp.float32)       # "side_input"
    ext = jax.random.normal(k3, (bs, N, F_), jnp.float32)    # "ext_input"
    adj = (jax.random.uniform(k4, (N, N)) > 0.4).astype(jnp.float32)
    adj = jnp.maximum(adj, jnp.eye(N, dtype=jnp.float32))    # ensure self-loops
    params = init_params(k5, in_cfeatures, F_, E, D)

    h_prime, ext_rep = graph_attention_forward(x, adj, ext, side, params,
                                               alpha=alpha, concat=True)
    jax.block_until_ready((h_prime, ext_rep))

    h_ref, e_ref = _reference_forward(x, adj, ext, side, params, alpha=alpha, concat=True)
    np.testing.assert_allclose(np.asarray(h_prime), np.asarray(h_ref), rtol=2e-4, atol=2e-4)
    np.testing.assert_allclose(np.asarray(ext_rep), np.asarray(e_ref), rtol=2e-4, atol=2e-4)

    print("KERNEL_OK")
</pallas_src>

<mosaic_0001>
module attributes {stable_mosaic.version = 11 : i64} {
  func.func @_gat_fused_kernel(%arg0: i32, %arg1: i32, %arg2: memref<8xf32, #tpu.memory_space<smem>>, %arg3: memref<1x8x1xf32, #tpu.memory_space<vmem>>, %arg4: memref<1x1x8xf32, #tpu.memory_space<vmem>>, %arg5: memref<1x8x1xf32, #tpu.memory_space<vmem>>, %arg6: memref<1x1x8xf32, #tpu.memory_space<vmem>>, %arg7: memref<8x8xf32, #tpu.memory_space<vmem>>, %arg8: memref<1x8x4xf32, #tpu.memory_space<vmem>>, %arg9: memref<1x4x8xf32, #tpu.memory_space<vmem>>, %arg10: memref<1x8xf32, #tpu.memory_space<vmem>>, %arg11: memref<1x8xf32, #tpu.memory_space<vmem>>, %arg12: memref<1x8x8xf32, #tpu.memory_space<vmem>>, %arg13: memref<1x8x8xf32, #tpu.memory_space<vmem>>) attributes {dimension_semantics = [#tpu.dimension_semantics<parallel>, #tpu.dimension_semantics<parallel>], iteration_bounds = array<i64: 2, 1>, scalar_prefetch = 0 : i64, scratch_operands = 0 : i64, tpu.core_type = #tpu.core_type<tc>, window_params = [{transform_indices = @transform_0, window_bounds = array<i64: 8>}, {transform_indices = @transform_1, window_bounds = array<i64: 1, 8, 1>}, {transform_indices = @transform_2, window_bounds = array<i64: 1, 1, 8>}, {transform_indices = @transform_3, window_bounds = array<i64: 1, 8, 1>}, {transform_indices = @transform_4, window_bounds = array<i64: 1, 1, 8>}, {transform_indices = @transform_5, window_bounds = array<i64: 8, 8>}, {transform_indices = @transform_6, window_bounds = array<i64: 1, 8, 4>}, {transform_indices = @transform_7, window_bounds = array<i64: 1, 4, 8>}, {pipeline_mode = #tpu.pipeline_mode<synchronous>, transform_indices = @transform_8, window_bounds = array<i64: 1, 8>}, {pipeline_mode = #tpu.pipeline_mode<synchronous>, transform_indices = @transform_9, window_bounds = array<i64: 1, 8>}, {transform_indices = @transform_10, window_bounds = array<i64: 1, 8, 8>}, {transform_indices = @transform_11, window_bounds = array<i64: 1, 8, 8>}]} {
    %c0 = arith.constant 0 : index
    %c0_0 = arith.constant 0 : index
    %c0_1 = arith.constant 0 : index
    %0 = vector.load %arg3[%c0, %c0_0, %c0_1] : memref<1x8x1xf32, #tpu.memory_space<vmem>>, vector<1x8x1xf32>
    %1 = vector.shape_cast %0 : vector<1x8x1xf32> to vector<8x1xf32>
    %c0_2 = arith.constant 0 : index
    %c0_3 = arith.constant 0 : index
    %c0_4 = arith.constant 0 : index
    %2 = vector.load %arg4[%c0_2, %c0_3, %c0_4] : memref<1x1x8xf32, #tpu.memory_space<vmem>>, vector<1x1x8xf32>
    %3 = vector.shape_cast %2 : vector<1x1x8xf32> to vector<1x8xf32>
    %c0_5 = arith.constant 0 : index
    %c0_6 = arith.constant 0 : index
    %c0_7 = arith.constant 0 : index
    %4 = vector.load %arg5[%c0_5, %c0_6, %c0_7] : memref<1x8x1xf32, #tpu.memory_space<vmem>>, vector<1x8x1xf32>
    %5 = vector.shape_cast %4 : vector<1x8x1xf32> to vector<8x1xf32>
    %c0_8 = arith.constant 0 : index
    %c0_9 = arith.constant 0 : index
    %c0_10 = arith.constant 0 : index
    %6 = vector.load %arg6[%c0_8, %c0_9, %c0_10] : memref<1x1x8xf32, #tpu.memory_space<vmem>>, vector<1x1x8xf32>
    %7 = vector.shape_cast %6 : vector<1x1x8xf32> to vector<1x8xf32>
    %c0_11 = arith.constant 0 : index
    %c0_12 = arith.constant 0 : index
    %8 = vector.load %arg7[%c0_11, %c0_12] : memref<8x8xf32, #tpu.memory_space<vmem>>, vector<8x8xf32>
    %c0_13 = arith.constant 0 : index
    %c0_14 = arith.constant 0 : index
    %c0_15 = arith.constant 0 : index
    %9 = vector.load %arg8[%c0_13, %c0_14, %c0_15] : memref<1x8x4xf32, #tpu.memory_space<vmem>>, vector<1x8x4xf32>
    %10 = vector.shape_cast %9 : vector<1x8x4xf32> to vector<8x4xf32>
    %c0_16 = arith.constant 0 : index
    %c0_17 = arith.constant 0 : index
    %c0_18 = arith.constant 0 : index
    %11 = vector.load %arg9[%c0_16, %c0_17, %c0_18] : memref<1x4x8xf32, #tpu.memory_space<vmem>>, vector<1x4x8xf32>
    %12 = vector.shape_cast %11 : vector<1x4x8xf32> to vector<4x8xf32>
    %c0_19 = arith.constant 0 : index
    %c0_20 = arith.constant 0 : index
    %13 = vector.load %arg10[%c0_19, %c0_20] : memref<1x8xf32, #tpu.memory_space<vmem>>, vector<1x8xf32>
    %c0_21 = arith.constant 0 : index
    %c0_22 = arith.constant 0 : index
    %14 = vector.load %arg11[%c0_21, %c0_22] : memref<1x8xf32, #tpu.memory_space<vmem>>, vector<1x8xf32>
    %c0_23 = arith.constant 0 : index
    %15 = memref.load %arg2[%c0_23] : memref<8xf32, #tpu.memory_space<smem>>
    %c1 = arith.constant 1 : index
    %16 = memref.load %arg2[%c1] : memref<8xf32, #tpu.memory_space<smem>>
    %c2 = arith.constant 2 : index
    %17 = memref.load %arg2[%c2] : memref<8xf32, #tpu.memory_space<smem>>
    %c3 = arith.constant 3 : index
    %18 = memref.load %arg2[%c3] : memref<8xf32, #tpu.memory_space<smem>>
    %c4 = arith.constant 4 : index
    %19 = memref.load %arg2[%c4] : memref<8xf32, #tpu.memory_space<smem>>
    %c5 = arith.constant 5 : index
    %20 = memref.load %arg2[%c5] : memref<8xf32, #tpu.memory_space<smem>>
    %c6 = arith.constant 6 : index
    %21 = memref.load %arg2[%c6] : memref<8xf32, #tpu.memory_space<smem>>
    %c7 = arith.constant 7 : index
    %22 = memref.load %arg2[%c7] : memref<8xf32, #tpu.memory_space<smem>>
    %23 = vector.broadcast %15 : f32 to vector<8x1xf32>
    %24 = arith.mulf %23, %1 : vector<8x1xf32>
    %25 = vector.broadcast %16 : f32 to vector<1x8xf32>
    %26 = arith.mulf %25, %3 : vector<1x8xf32>
    %27 = vector.broadcast %24 : vector<8x1xf32> to vector<8x8xf32>
    %28 = vector.broadcast %26 : vector<1x8xf32> to vector<8x8xf32>
    %29 = arith.addf %27, %28 : vector<8x8xf32>
    %cst = arith.constant 0.000000e+00 : f32
    %30 = vector.broadcast %cst : f32 to vector<8x8xf32>
    %31 = arith.cmpf ogt, %29, %30 : vector<8x8xf32>
    %cst_24 = arith.constant 4.000000e-02 : f32
    %32 = vector.broadcast %cst_24 : f32 to vector<8x8xf32>
    %33 = arith.mulf %32, %29 : vector<8x8xf32>
    %34 = arith.select %31, %29, %33 : vector<8x8xi1>, vector<8x8xf32>
    %35 = vector.broadcast %17 : f32 to vector<8x1xf32>
    %36 = arith.mulf %35, %5 : vector<8x1xf32>
    %37 = vector.broadcast %18 : f32 to vector<1x8xf32>
    %38 = arith.mulf %37, %7 : vector<1x8xf32>
    %39 = vector.broadcast %36 : vector<8x1xf32> to vector<8x8xf32>
    %40 = vector.broadcast %38 : vector<1x8xf32> to vector<8x8xf32>
    %41 = arith.addf %39, %40 : vector<8x8xf32>
    %cst_25 = arith.constant 0.000000e+00 : f32
    %42 = vector.broadcast %cst_25 : f32 to vector<8x8xf32>
    %43 = arith.cmpf ogt, %41, %42 : vector<8x8xf32>
    %cst_26 = arith.constant 4.000000e-02 : f32
    %44 = vector.broadcast %cst_26 : f32 to vector<8x8xf32>
    %45 = arith.mulf %44, %41 : vector<8x8xf32>
    %46 = arith.select %43, %41, %45 : vector<8x8xi1>, vector<8x8xf32>
    %cst_27 = arith.constant 0.000000e+00 : f32
    %47 = vector.broadcast %cst_27 : f32 to vector<8x8xf32>
    %48 = arith.cmpf ogt, %8, %47 : vector<8x8xf32>
    %49 = arith.addf %34, %46 : vector<8x8xf32>
    %cst_28 = arith.constant -1.800000e+16 : f32
    %50 = vector.broadcast %cst_28 : f32 to vector<8x8xf32>
    %51 = arith.select %48, %49, %50 : vector<8x8xi1>, vector<8x8xf32>
    %cst_29 = arith.constant 0.000000e+00 : f32
    %52 = vector.broadcast %cst_29 : f32 to vector<8x8xf32>
    %53 = arith.cmpf ogt, %51, %52 : vector<8x8xf32>
    %cst_30 = arith.constant -9.000000e+15 : f32
    %54 = vector.broadcast %cst_30 : f32 to vector<8x8xf32>
    %55 = arith.select %53, %51, %54 : vector<8x8xi1>, vector<8x8xf32>
    %cst_31 = arith.constant dense<0xFF800000> : vector<8xf32>
    %56 = vector.multi_reduction <maximumf>, %55, %cst_31 [1] : vector<8x8xf32> to vector<8xf32>
    %57 = vector.shape_cast %56 : vector<8xf32> to vector<8x1xf32>
    %58 = vector.broadcast %57 : vector<8x1xf32> to vector<8x8xf32>
    %59 = arith.subf %55, %58 : vector<8x8xf32>
    %60 = math.exp %59 : vector<8x8xf32>
    %cst_32 = arith.constant dense<0.000000e+00> : vector<8xf32>
    %61 = vector.multi_reduction <add>, %60, %cst_32 [1] : vector<8x8xf32> to vector<8xf32>
    %62 = vector.shape_cast %61 : vector<8xf32> to vector<8x1xf32>
    %cst_33 = arith.constant 1.000000e+00 : f32
    %63 = vector.broadcast %cst_33 : f32 to vector<8x1xf32>
    %64 = arith.divf %63, %62 : vector<8x1xf32>
    %65 = vector.broadcast %64 : vector<8x1xf32> to vector<8x8xf32>
    %66 = arith.mulf %60, %65 : vector<8x8xf32>
    %67 = vector.broadcast %3 : vector<1x8xf32> to vector<8x8xf32>
    %68 = arith.mulf %66, %67 : vector<8x8xf32>
    %cst_34 = arith.constant dense<0.000000e+00> : vector<8xf32>
    %69 = vector.multi_reduction <add>, %68, %cst_34 [1] : vector<8x8xf32> to vector<8xf32>
    %70 = vector.shape_cast %69 : vector<8xf32> to vector<8x1xf32>
    %71 = vector.broadcast %70 : vector<8x1xf32> to vector<8x8xf32>
    %72 = vector.broadcast %13 : vector<1x8xf32> to vector<8x8xf32>
    %73 = arith.mulf %71, %72 : vector<8x8xf32>
    %cst_35 = arith.constant 0.000000e+00 : f32
    %74 = vector.broadcast %cst_35 : f32 to vector<8x8xf32>
    %75 = arith.cmpf ogt, %73, %74 : vector<8x8xf32>
    %76 = math.exp %73 : vector<8x8xf32>
    %cst_36 = arith.constant 1.000000e+00 : f32
    %77 = vector.broadcast %cst_36 : f32 to vector<8x8xf32>
    %78 = arith.subf %76, %77 : vector<8x8xf32>
    %79 = arith.select %75, %73, %78 : vector<8x8xi1>, vector<8x8xf32>
    %c0_37 = arith.constant 0 : index
    %c0_38 = arith.constant 0 : index
    %c0_39 = arith.constant 0 : index
    %80 = vector.load %arg12[%c0_37, %c0_38, %c0_39] : memref<1x8x8xf32, #tpu.memory_space<vmem>>, vector<1x8x8xf32>
    %81 = vector.shape_cast %80 : vector<1x8x8xf32> to vector<8x8xf32>
    %82 = vector.shape_cast %79 : vector<8x8xf32> to vector<1x8x8xf32>
    tpu.vector_store %arg12[%c0_37, %c0_38, %c0_39], %82 {strides = array<i32>} : memref<1x8x8xf32, #tpu.memory_space<vmem>>, vector<1x8x8xf32>,
    %83 = vector.broadcast %19 : f32 to vector<8x1xf32>
    %84 = arith.mulf %83, %1 : vector<8x1xf32>
    %85 = vector.broadcast %21 : f32 to vector<1x8xf32>
    %86 = arith.mulf %85, %3 : vector<1x8xf32>
    %87 = vector.broadcast %84 : vector<8x1xf32> to vector<8x8xf32>
    %88 = vector.broadcast %86 : vector<1x8xf32> to vector<8x8xf32>
    %89 = arith.addf %87, %88 : vector<8x8xf32>
    %90 = vector.broadcast %20 : f32 to vector<8x1xf32>
    %91 = arith.mulf %90, %1 : vector<8x1xf32>
    %92 = vector.broadcast %22 : f32 to vector<1x8xf32>
    %93 = arith.mulf %92, %3 : vector<1x8xf32>
    %94 = vector.broadcast %91 : vector<8x1xf32> to vector<8x8xf32>
    %95 = vector.broadcast %93 : vector<1x8xf32> to vector<8x8xf32>
    %96 = arith.addf %94, %95 : vector<8x8xf32>
    %97 = vector.extract_strided_slice %10 {offsets = [0, 0], sizes = [8, 1], strides = [1, 1]} : vector<8x4xf32> to vector<8x1xf32>
    %98 = vector.extract_strided_slice %12 {offsets = [0, 0], sizes = [1, 8], strides = [1, 1]} : vector<4x8xf32> to vector<1x8xf32>
    %99 = vector.broadcast %97 : vector<8x1xf32> to vector<8x8xf32>
    %100 = arith.mulf %89, %99 : vector<8x8xf32>
    %101 = vector.broadcast %98 : vector<1x8xf32> to vector<8x8xf32>
    %102 = arith.mulf %96, %101 : vector<8x8xf32>
    %103 = arith.addf %100, %102 : vector<8x8xf32>
    %cst_40 = arith.constant 0.000000e+00 : f32
    %104 = vector.broadcast %cst_40 : f32 to vector<8x8xf32>
    %105 = arith.cmpf ogt, %103, %104 : vector<8x8xf32>
    %cst_41 = arith.constant -9.000000e+15 : f32
    %106 = vector.broadcast %cst_41 : f32 to vector<8x8xf32>
    %107 = arith.select %105, %103, %106 : vector<8x8xi1>, vector<8x8xf32>
    %108 = vector.extract_strided_slice %10 {offsets = [0, 1], sizes = [8, 1], strides = [1, 1]} : vector<8x4xf32> to vector<8x1xf32>
    %109 = vector.extract_strided_slice %12 {offsets = [1, 0], sizes = [1, 8], strides = [1, 1]} : vector<4x8xf32> to vector<1x8xf32>
    %110 = vector.broadcast %108 : vector<8x1xf32> to vector<8x8xf32>
    %111 = arith.mulf %89, %110 : vector<8x8xf32>
    %112 = vector.broadcast %109 : vector<1x8xf32> to vector<8x8xf32>
    %113 = arith.mulf %96, %112 : vector<8x8xf32>
    %114 = arith.addf %111, %113 : vector<8x8xf32>
    %cst_42 = arith.constant 0.000000e+00 : f32
    %115 = vector.broadcast %cst_42 : f32 to vector<8x8xf32>
    %116 = arith.cmpf ogt, %114, %115 : vector<8x8xf32>
    %cst_43 = arith.constant -9.000000e+15 : f32
    %117 = vector.broadcast %cst_43 : f32 to vector<8x8xf32>
    %118 = arith.select %116, %114, %117 : vector<8x8xi1>, vector<8x8xf32>
    %119 = arith.maximumf %107, %118 : vector<8x8xf32>
    %120 = vector.extract_strided_slice %10 {offsets = [0, 2], sizes = [8, 1], strides = [1, 1]} : vector<8x4xf32> to vector<8x1xf32>
    %121 = vector.extract_strided_slice %12 {offsets = [2, 0], sizes = [1, 8], strides = [1, 1]} : vector<4x8xf32> to vector<1x8xf32>
    %122 = vector.broadcast %120 : vector<8x1xf32> to vector<8x8xf32>
    %123 = arith.mulf %89, %122 : vector<8x8xf32>
    %124 = vector.broadcast %121 : vector<1x8xf32> to vector<8x8xf32>
    %125 = arith.mulf %96, %124 : vector<8x8xf32>
    %126 = arith.addf %123, %125 : vector<8x8xf32>
    %cst_44 = arith.constant 0.000000e+00 : f32
    %127 = vector.broadcast %cst_44 : f32 to vector<8x8xf32>
    %128 = arith.cmpf ogt, %126, %127 : vector<8x8xf32>
    %cst_45 = arith.constant -9.000000e+15 : f32
    %129 = vector.broadcast %cst_45 : f32 to vector<8x8xf32>
    %130 = arith.select %128, %126, %129 : vector<8x8xi1>, vector<8x8xf32>
    %131 = arith.maximumf %119, %130 : vector<8x8xf32>
    %132 = vector.extract_strided_slice %10 {offsets = [0, 3], sizes = [8, 1], strides = [1, 1]} : vector<8x4xf32> to vector<8x1xf32>
    %133 = vector.extract_strided_slice %12 {offsets = [3, 0], sizes = [1, 8], strides = [1, 1]} : vector<4x8xf32> to vector<1x8xf32>
    %134 = vector.broadcast %132 : vector<8x1xf32> to vector<8x8xf32>
    %135 = arith.mulf %89, %134 : vector<8x8xf32>
    %136 = vector.broadcast %133 : vector<1x8xf32> to vector<8x8xf32>
    %137 = arith.mulf %96, %136 : vector<8x8xf32>
    %138 = arith.addf %135, %137 : vector<8x8xf32>
    %cst_46 = arith.constant 0.000000e+00 : f32
    %139 = vector.broadcast %cst_46 : f32 to vector<8x8xf32>
    %140 = arith.cmpf ogt, %138, %139 : vector<8x8xf32>
    %cst_47 = arith.constant -9.000000e+15 : f32
    %141 = vector.broadcast %cst_47 : f32 to vector<8x8xf32>
    %142 = arith.select %140, %138, %141 : vector<8x8xi1>, vector<8x8xf32>
    %143 = arith.maximumf %131, %142 : vector<8x8xf32>
    %cst_48 = arith.constant 0.000000e+00 : f32
    %144 = vector.broadcast %cst_48 : f32 to vector<8x8xf32>
    %cst_49 = arith.constant 0.000000e+00 : f32
    %145 = vector.broadcast %cst_49 : f32 to vector<8x8xf32>
    %146 = arith.subf %107, %143 : vector<8x8xf32>
    %147 = math.exp %146 : vector<8x8xf32>
    %148 = arith.addf %144, %147 : vector<8x8xf32>
    %149 = vector.extract_strided_slice %10 {offsets = [0, 0], sizes = [8, 1], strides = [1, 1]} : vector<8x4xf32> to vector<8x1xf32>
    %150 = vector.broadcast %149 : vector<8x1xf32> to vector<8x8xf32>
    %151 = arith.mulf %147, %150 : vector<8x8xf32>
    %152 = arith.addf %145, %151 : vector<8x8xf32>
    %153 = arith.subf %118, %143 : vector<8x8xf32>
    %154 = math.exp %153 : vector<8x8xf32>
    %155 = arith.addf %148, %154 : vector<8x8xf32>
    %156 = vector.extract_strided_slice %10 {offsets = [0, 1], sizes = [8, 1], strides = [1, 1]} : vector<8x4xf32> to vector<8x1xf32>
    %157 = vector.broadcast %156 : vector<8x1xf32> to vector<8x8xf32>
    %158 = arith.mulf %154, %157 : vector<8x8xf32>
    %159 = arith.addf %152, %158 : vector<8x8xf32>
    %160 = arith.subf %130, %143 : vector<8x8xf32>
    %161 = math.exp %160 : vector<8x8xf32>
    %162 = arith.addf %155, %161 : vector<8x8xf32>
    %163 = vector.extract_strided_slice %10 {offsets = [0, 2], sizes = [8, 1], strides = [1, 1]} : vector<8x4xf32> to vector<8x1xf32>
    %164 = vector.broadcast %163 : vector<8x1xf32> to vector<8x8xf32>
    %165 = arith.mulf %161, %164 : vector<8x8xf32>
    %166 = arith.addf %159, %165 : vector<8x8xf32>
    %167 = arith.subf %142, %143 : vector<8x8xf32>
    %168 = math.exp %167 : vector<8x8xf32>
    %169 = arith.addf %162, %168 : vector<8x8xf32>
    %170 = vector.extract_strided_slice %10 {offsets = [0, 3], sizes = [8, 1], strides = [1, 1]} : vector<8x4xf32> to vector<8x1xf32>
    %171 = vector.broadcast %170 : vector<8x1xf32> to vector<8x8xf32>
    %172 = arith.mulf %168, %171 : vector<8x8xf32>
    %173 = arith.addf %166, %172 : vector<8x8xf32>
    %174 = arith.mulf %66, %173 : vector<8x8xf32>
    %175 = arith.divf %174, %169 : vector<8x8xf32>
    %cst_50 = arith.constant dense<0.000000e+00> : vector<8xf32>
    %176 = vector.multi_reduction <add>, %175, %cst_50 [1] : vector<8x8xf32> to vector<8xf32>
    %177 = vector.shape_cast %176 : vector<8xf32> to vector<8x1xf32>
    %178 = vector.broadcast %177 : vector<8x1xf32> to vector<8x8xf32>
    %179 = vector.broadcast %14 : vector<1x8xf32> to vector<8x8xf32>
    %180 = arith.mulf %178, %179 : vector<8x8xf32>
    %cst_51 = arith.constant 0.000000e+00 : f32
    %181 = vector.broadcast %cst_51 : f32 to vector<8x8xf32>
    %182 = arith.cmpf ogt, %180, %181 : vector<8x8xf32>
    %183 = math.exp %180 : vector<8x8xf32>
    %cst_52 = arith.constant 1.000000e+00 : f32
    %184 = vector.broadcast %cst_52 : f32 to vector<8x8xf32>
    %185 = arith.subf %183, %184 : vector<8x8xf32>
    %186 = arith.select %182, %180, %185 : vector<8x8xi1>, vector<8x8xf32>
    %c0_53 = arith.constant 0 : index
    %c0_54 = arith.constant 0 : index
    %c0_55 = arith.constant 0 : index
    %187 = vector.load %arg13[%c0_53, %c0_54, %c0_55] : memref<1x8x8xf32, #tpu.memory_space<vmem>>, vector<1x8x8xf32>
    %188 = vector.shape_cast %187 : vector<1x8x8xf32> to vector<8x8xf32>
    %189 = vector.shape_cast %186 : vector<8x8xf32> to vector<1x8x8xf32>
    tpu.vector_store %arg13[%c0_53, %c0_54, %c0_55], %189 {strides = array<i32>} : memref<1x8x8xf32, #tpu.memory_space<vmem>>, vector<1x8x8xf32>,
    return
  }
  func.func @transform_0(%arg0: i32, %arg1: i32) -> i32 {
    %c0_i32 = arith.constant 0 : i32
    %c0_i32_0 = arith.constant 0 : i32
    return %c0_i32 : i32
  }
  func.func @transform_1(%arg0: i32, %arg1: i32) -> (i32, i32, i32) {
    %c0_i32 = arith.constant 0 : i32
    %c0_i32_0 = arith.constant 0 : i32
    return %arg0, %arg1, %c0_i32 : i32, i32, i32
  }
  func.func @transform_2(%arg0: i32, %arg1: i32) -> (i32, i32, i32) {
    %c0_i32 = arith.constant 0 : i32
    %c0_i32_0 = arith.constant 0 : i32
    %c0_i32_1 = arith.constant 0 : i32
    return %arg0, %c0_i32, %c0_i32_0 : i32, i32, i32
  }
  func.func @transform_3(%arg0: i32, %arg1: i32) -> (i32, i32, i32) {
    %c0_i32 = arith.constant 0 : i32
    %c0_i32_0 = arith.constant 0 : i32
    return %arg0, %arg1, %c0_i32 : i32, i32, i32
  }
  func.func @transform_4(%arg0: i32, %arg1: i32) -> (i32, i32, i32) {
    %c0_i32 = arith.constant 0 : i32
    %c0_i32_0 = arith.constant 0 : i32
    %c0_i32_1 = arith.constant 0 : i32
    return %arg0, %c0_i32, %c0_i32_0 : i32, i32, i32
  }
  func.func @transform_5(%arg0: i32, %arg1: i32) -> (i32, i32) {
    %c0_i32 = arith.constant 0 : i32
    %c0_i32_0 = arith.constant 0 : i32
    return %arg1, %c0_i32 : i32, i32
  }
  func.func @transform_6(%arg0: i32, %arg1: i32) -> (i32, i32, i32) {
    %c0_i32 = arith.constant 0 : i32
    %c0_i32_0 = arith.constant 0 : i32
    return %arg0, %arg1, %c0_i32 : i32, i32, i32
  }
  func.func @transform_7(%arg0: i32, %arg1: i32) -> (i32, i32, i32) {
    %c0_i32 = arith.constant 0 : i32
    %c0_i32_0 = arith.constant 0 : i32
    %c0_i32_1 = arith.constant 0 : i32
    return %arg0, %c0_i32, %c0_i32_0 : i32, i32, i32
  }
  func.func @transform_8(%arg0: i32, %arg1: i32) -> (i32, i32) {
    %c0_i32 = arith.constant 0 : i32
    %c0_i32_0 = arith.constant 0 : i32
    %c0_i32_1 = arith.constant 0 : i32
    return %c0_i32, %c0_i32_0 : i32, i32
  }
  func.func @transform_9(%arg0: i32, %arg1: i32) -> (i32, i32) {
    %c0_i32 = arith.constant 0 : i32
    %c0_i32_0 = arith.constant 0 : i32
    %c0_i32_1 = arith.constant 0 : i32
    return %c0_i32, %c0_i32_0 : i32, i32
  }
  func.func @transform_10(%arg0: i32, %arg1: i32) -> (i32, i32, i32) {
    %c0_i32 = arith.constant 0 : i32
    %c0_i32_0 = arith.constant 0 : i32
    return %arg0, %arg1, %c0_i32 : i32, i32, i32
  }
  func.func @transform_11(%arg0: i32, %arg1: i32) -> (i32, i32, i32) {
    %c0_i32 = arith.constant 0 : i32
    %c0_i32_0 = arith.constant 0 : i32
    return %arg0, %arg1, %c0_i32 : i32, i32, i32
  }
}

</mosaic_0001>

<llo_original>
// kernel: tpu_custom_call.1
$region0: #{tpu_custom_call.1}
  #allocation0 [shape = 'u32[]', space=smem, size = 0x4, offset = 0x4, fixed_abs, tag = 'smem constant byte address 0x4 - core index']
  #allocation1 [shape = 'u32[144,128]{1,0:T(1,128)}', space=vmem, size = 0x12000, scoped, tag = 'internal scratch']
  %s0 = inlined_call_operand.vmem [shape: f32[8], index: 0, kind: input, shape index: {}]
  %s1 = inlined_call_operand.vmem [shape: f32[2,8,1], index: 1, kind: input, shape index: {}]
  %s2 = inlined_call_operand.vmem [shape: f32[2,1,8], index: 2, kind: input, shape index: {}]
  %s3 = inlined_call_operand.vmem [shape: f32[2,8,1], index: 3, kind: input, shape index: {}]
  %s4 = inlined_call_operand.vmem [shape: f32[2,1,8], index: 4, kind: input, shape index: {}]
  %s5 = inlined_call_operand.vmem [shape: f32[8,8], index: 5, kind: input, shape index: {}]
  %s6 = inlined_call_operand.vmem [shape: f32[2,8,4], index: 6, kind: input, shape index: {}]
  %s7 = inlined_call_operand.vmem [shape: f32[2,4,8], index: 7, kind: input, shape index: {}]
  %s8 = inlined_call_operand.vmem [shape: f32[1,8], index: 8, kind: input, shape index: {}]
  %s9 = inlined_call_operand.vmem [shape: f32[1,8], index: 9, kind: input, shape index: {}]
  %s10 = inlined_call_operand.hbm [shape: f32[2,8,8], index: 10, kind: output, shape index: {0}]
  %s11 = inlined_call_operand.hbm [shape: f32[2,8,8], index: 11, kind: output, shape index: {1}]
  %12 = xla_tuple %s10, %s11
  %s13 = sld [smem:[#allocation0]]
  $region85: #{tpu_custom_call.1} parent=0
    _
  %s15 = ssub.s32 1, %s13
  %s16 = scalar_select 0, %s15, %s13
  $region1: #{tpu_custom_call.1} parent=0
    #allocation2 [shape = 'u8[512]{0}', space=smem, size = 0x200, scoped, tag = 'input window, operand 0, single buffered']
    #allocation3 [shape = 's32[2]{0}', space=sflag, size = 0x8, scoped, tag = 'scoped memory for tpu_custom_call.1']
    #allocation4 [shape = 's32[2]{0}', space=sflag, size = 0x8, scoped, tag = 'scoped memory for tpu_custom_call.1']
    #allocation5 [shape = 'u8[8192]{0}', space=vmem, size = 0x2000, scoped, tag = 'output window, operand 0']
    #allocation6 [shape = 'u8[8192]{0}', space=vmem, size = 0x2000, scoped, tag = 'output window, operand 1']
    #allocation7 [shape = 's32[2]{0}', space=sflag, size = 0x8, scoped, tag = 'scoped memory for tpu_custom_call.1']
    %17 = vsyncpa [#allocation4], 0
    %18 = vsyncpa [#allocation3], 0
    %s19 = scalar_lea.sflag [#allocation3], 1
    %20 = vsyncpa %s19, 0
    %21 = vsyncpa [#allocation7], 0
    %s22 = scalar_lea.sflag [#allocation7], 1
    %23 = vsyncpa %s22, 0
    loop: start=0, step=1, limit=4
    $region2: #{tpu_custom_call.1} parent=1 // loop_pre_header
      _
    $region3: #{tpu_custom_call.1} parent=1 // loop_header
      %s25 = sphi 0, %s29
      %p26 = scmp.ge.s32.totalorder %s25, 4
      %s32 = sphi 0, %s44
      %s33 = sphi 0, %s40
      %s34 = sphi 0, %s32
      %s35 = sphi 0, %s33
      %s36 = sphi 0, %s34
      %s37 = sphi 0, %s35
      %s45 = sphi 0, %s45
      %s47 = sphi 0, %s45
      %s48 = sphi 0, %s47
      %s62 = sphi 0, %s48
      %s70 = sphi 0, %s72
      %s73 = sphi 0, %s70
      %s74 = sphi 0, %s73
      %s90 = sphi 0, %s74
      %s96 = sphi 0, %s98
      %s99 = sphi 0, %s96
      %s100 = sphi 0, %s99
      %s116 = sphi 0, %s100
      %s124 = sphi 0, %s126
      %s127 = sphi 0, %s124
      %s128 = sphi 0, %s127
      %s144 = sphi 0, %s128
      %s150 = sphi 0, %s152
      %s153 = sphi 0, %s150
      %s154 = sphi 0, %s153
      %s170 = sphi 0, %s154
      %s176 = sphi 0, %s178
      %s179 = sphi 0, %s176
      %s180 = sphi 0, %s179
      %s196 = sphi 0, %s180
      %s204 = sphi 0, %s206
      %s207 = sphi 0, %s204
      %s208 = sphi 0, %s207
      %s224 = sphi 0, %s208
      %s230 = sphi 0, %s232
      %s233 = sphi 0, %s230
      %s234 = sphi 0, %s233
      %s250 = sphi 0, %s234
      %s254 = sphi 0, %s254
      %s256 = sphi 0, %s254
      %s257 = sphi 0, %s256
      %s271 = sphi 0, %s257
      %s275 = sphi 0, %s275
      %s277 = sphi 0, %s275
      %s278 = sphi 0, %s277
      %s292 = sphi 0, %s278
      %s300 = sphi 0, %s302
      %s303 = sphi 0, %s300
      %s304 = sphi 0, %s303
      %s320 = sphi 0, %s304
      %s328 = sphi 0, %s330
      %s331 = sphi 0, %s328
      %s332 = sphi 0, %s331
      %s348 = sphi 0, %s332
    $region4: #{tpu_custom_call.1} parent=1 // loop_header_branch
      %28 = sbr.rel (%p26) target = $region8
    $region5: #{tpu_custom_call.1} parent=1 // loop_body
      %s30 = ssub.s32 %s25, 1
      %s31 = ssub.s32 %s25, 2
      %s38 = sadd.s32 1, %s33
      %p39 = scmp.ge.s32.totalorder %s38, 1
      %s40 = scalar_select %p39, 0, %s38
      %s41 = sadd.s32 1, %s32
      %s42 = scalar_select %p39, %s41, %s32
      %p43 = scmp.ge.s32.totalorder %s42, 2
      %s44 = scalar_select %p43, 0, %s42
      %s46 = sadd.s32 %s45, 1
      %p49 = scmp.eq.s32.totalorder %s25, 1
      %p50 = scmp.ne.s32.totalorder %s45, %s47
      %p51 = scmp.eq.s32.totalorder %s25, 0
      %p52 = por %p50, %p51
      %p53 = scmp.ne.s32.totalorder %s45, %s47
      %p54 = scmp.eq.s32.totalorder %s30, 1
      %p55 = por %p53, %p54
      %p56 = scmp.ne.s32.totalorder %s47, %s48
      %p57 = scmp.eq.s32.totalorder %s30, 0
      %p58 = por %p56, %p57
      %p59 = scmp.ne.s32.totalorder %s47, %s48
      %p60 = scmp.eq.s32.totalorder %s31, 1
      %p61 = por %p59, %p60
      %p63 = scmp.ne.s32.totalorder %s48, %s62
      %p64 = scmp.eq.s32.totalorder %s31, 0
      %p65 = por %p63, %p64
      %s66 = ssub.s32 %s32, %s44
      %s67 = ssub.s32 %s33, %s40
      %s68 = sor.u32 %s66, %s67
      %p69 = scmp.eq.s32.totalorder %s68, 0
      %s71 = sadd.s32 %s70, 1
      %s72 = scalar_select %p69, %s70, %s71
      %p75 = pneg %p69
      %p76 = scmp.eq.s32.totalorder %s25, 1
      %p77 = por %p75, %p76
      %p78 = scmp.ne.s32.totalorder %s70, %s73
      %p79 = scmp.eq.s32.totalorder %s25, 0
      %p80 = por %p78, %p79
      %p81 = scmp.ne.s32.totalorder %s70, %s73
      %p82 = scmp.eq.s32.totalorder %s30, 1
      %p83 = por %p81, %p82
      %p84 = scmp.ne.s32.totalorder %s73, %s74
      %p85 = scmp.eq.s32.totalorder %s30, 0
      %p86 = por %p84, %p85
      %p87 = scmp.ne.s32.totalorder %s73, %s74
      %p88 = scmp.eq.s32.totalorder %s31, 1
      %p89 = por %p87, %p88
      %p91 = scmp.ne.s32.totalorder %s74, %s90
      %p92 = scmp.eq.s32.totalorder %s31, 0
      %p93 = por %p91, %p92
      %s94 = ssub.s32 %s32, %s44
      %p95 = scmp.eq.s32.totalorder %s94, 0
      %s97 = sadd.s32 %s96, 1
      %s98 = scalar_select %p95, %s96, %s97
      %p101 = pneg %p95
      %p102 = scmp.eq.s32.totalorder %s25, 1
      %p103 = por %p101, %p102
      %p104 = scmp.ne.s32.totalorder %s96, %s99
      %p105 = scmp.eq.s32.totalorder %s25, 0
      %p106 = por %p104, %p105
      %p107 = scmp.ne.s32.totalorder %s96, %s99
      %p108 = scmp.eq.s32.totalorder %s30, 1
      %p109 = por %p107, %p108
      %p110 = scmp.ne.s32.totalorder %s99, %s100
      %p111 = scmp.eq.s32.totalorder %s30, 0
      %p112 = por %p110, %p111
      %p113 = scmp.ne.s32.totalorder %s99, %s100
      %p114 = scmp.eq.s32.totalorder %s31, 1
      %p115 = por %p113, %p114
      %p117 = scmp.ne.s32.totalorder %s100, %s116
      %p118 = scmp.eq.s32.totalorder %s31, 0
      %p119 = por %p117, %p118
      %s120 = ssub.s32 %s32, %s44
      %s121 = ssub.s32 %s33, %s40
      %s122 = sor.u32 %s120, %s121
      %p123 = scmp.eq.s32.totalorder %s122, 0
      %s125 = sadd.s32 %s124, 1
      %s126 = scalar_select %p123, %s124, %s125
      %p129 = pneg %p123
      %p130 = scmp.eq.s32.totalorder %s25, 1
      %p131 = por %p129, %p130
      %p132 = scmp.ne.s32.totalorder %s124, %s127
      %p133 = scmp.eq.s32.totalorder %s25, 0
      %p134 = por %p132, %p133
      %p135 = scmp.ne.s32.totalorder %s124, %s127
      %p136 = scmp.eq.s32.totalorder %s30, 1
      %p137 = por %p135, %p136
      %p138 = scmp.ne.s32.totalorder %s127, %s128
      %p139 = scmp.eq.s32.totalorder %s30, 0
      %p140 = por %p138, %p139
      %p141 = scmp.ne.s32.totalorder %s127, %s128
      %p142 = scmp.eq.s32.totalorder %s31, 1
      %p143 = por %p141, %p142
      %p145 = scmp.ne.s32.totalorder %s128, %s144
      %p146 = scmp.eq.s32.totalorder %s31, 0
      %p147 = por %p145, %p146
      %s148 = ssub.s32 %s32, %s44
      %p149 = scmp.eq.s32.totalorder %s148, 0
      %s151 = sadd.s32 %s150, 1
      %s152 = scalar_select %p149, %s150, %s151
      %p155 = pneg %p149
      %p156 = scmp.eq.s32.totalorder %s25, 1
      %p157 = por %p155, %p156
      %p158 = scmp.ne.s32.totalorder %s150, %s153
      %p159 = scmp.eq.s32.totalorder %s25, 0
      %p160 = por %p158, %p159
      %p161 = scmp.ne.s32.totalorder %s150, %s153
      %p162 = scmp.eq.s32.totalorder %s30, 1
      %p163 = por %p161, %p162
      %p164 = scmp.ne.s32.totalorder %s153, %s154
      %p165 = scmp.eq.s32.totalorder %s30, 0
      %p166 = por %p164, %p165
      %p167 = scmp.ne.s32.totalorder %s153, %s154
      %p168 = scmp.eq.s32.totalorder %s31, 1
      %p169 = por %p167, %p168
      %p171 = scmp.ne.s32.totalorder %s154, %s170
      %p172 = scmp.eq.s32.totalorder %s31, 0
      %p173 = por %p171, %p172
      %s174 = ssub.s32 %s33, %s40
      %p175 = scmp.eq.s32.totalorder %s174, 0
      %s177 = sadd.s32 %s176, 1
      %s178 = scalar_select %p175, %s176, %s177
      %p181 = pneg %p175
      %p182 = scmp.eq.s32.totalorder %s25, 1
      %p183 = por %p181, %p182
      %p184 = scmp.ne.s32.totalorder %s176, %s179
      %p185 = scmp.eq.s32.totalorder %s25, 0
      %p186 = por %p184, %p185
      %p187 = scmp.ne.s32.totalorder %s176, %s179
      %p188 = scmp.eq.s32.totalorder %s30, 1
      %p189 = por %p187, %p188
      %p190 = scmp.ne.s32.totalorder %s179, %s180
      %p191 = scmp.eq.s32.totalorder %s30, 0
      %p192 = por %p190, %p191
      %p193 = scmp.ne.s32.totalorder %s179, %s180
      %p194 = scmp.eq.s32.totalorder %s31, 1
      %p195 = por %p193, %p194
      %p197 = scmp.ne.s32.totalorder %s180, %s196
      %p198 = scmp.eq.s32.totalorder %s31, 0
      %p199 = por %p197, %p198
      %s200 = ssub.s32 %s32, %s44
      %s201 = ssub.s32 %s33, %s40
      %s202 = sor.u32 %s200, %s201
      %p203 = scmp.eq.s32.totalorder %s202, 0
      %s205 = sadd.s32 %s204, 1
      %s206 = scalar_select %p203, %s204, %s205
      %p209 = pneg %p203
      %p210 = scmp.eq.s32.totalorder %s25, 1
      %p211 = por %p209, %p210
      %p212 = scmp.ne.s32.totalorder %s204, %s207
      %p213 = scmp.eq.s32.totalorder %s25, 0
      %p214 = por %p212, %p213
      %p215 = scmp.ne.s32.totalorder %s204, %s207
      %p216 = scmp.eq.s32.totalorder %s30, 1
      %p217 = por %p215, %p216
      %p218 = scmp.ne.s32.totalorder %s207, %s208
      %p219 = scmp.eq.s32.totalorder %s30, 0
      %p220 = por %p218, %p219
      %p221 = scmp.ne.s32.totalorder %s207, %s208
      %p222 = scmp.eq.s32.totalorder %s31, 1
      %p223 = por %p221, %p222
      %p225 = scmp.ne.s32.totalorder %s208, %s224
      %p226 = scmp.eq.s32.totalorder %s31, 0
      %p227 = por %p225, %p226
      %s228 = ssub.s32 %s32, %s44
      %p229 = scmp.eq.s32.totalorder %s228, 0
      %s231 = sadd.s32 %s230, 1
      %s232 = scalar_select %p229, %s230, %s231
      %p235 = pneg %p229
      %p236 = scmp.eq.s32.totalorder %s25, 1
      %p237 = por %p235, %p236
      %p238 = scmp.ne.s32.totalorder %s230, %s233
      %p239 = scmp.eq.s32.totalorder %s25, 0
      %p240 = por %p238, %p239
      %p241 = scmp.ne.s32.totalorder %s230, %s233
      %p242 = scmp.eq.s32.totalorder %s30, 1
      %p243 = por %p241, %p242
      %p244 = scmp.ne.s32.totalorder %s233, %s234
      %p245 = scmp.eq.s32.totalorder %s30, 0
      %p246 = por %p244, %p245
      %p247 = scmp.ne.s32.totalorder %s233, %s234
      %p248 = scmp.eq.s32.totalorder %s31, 1
      %p249 = por %p247, %p248
      %p251 = scmp.ne.s32.totalorder %s234, %s250
      %p252 = scmp.eq.s32.totalorder %s31, 0
      %p253 = por %p251, %p252
      %s255 = sadd.s32 %s254, 1
      %p258 = scmp.eq.s32.totalorder %s25, 1
      %p259 = scmp.ne.s32.totalorder %s254, %s256
      %p260 = scmp.eq.s32.totalorder %s25, 0
      %p261 = por %p259, %p260
      %p262 = scmp.ne.s32.totalorder %s254, %s256
      %p263 = scmp.eq.s32.totalorder %s30, 1
      %p264 = por %p262, %p263
      %p265 = scmp.ne.s32.totalorder %s256, %s257
      %p266 = scmp.eq.s32.totalorder %s30, 0
      %p267 = por %p265, %p266
      %p268 = scmp.ne.s32.totalorder %s256, %s257
      %p269 = scmp.eq.s32.totalorder %s31, 1
      %p270 = por %p268, %p269
      %p272 = scmp.ne.s32.totalorder %s257, %s271
      %p273 = scmp.eq.s32.totalorder %s31, 0
      %p274 = por %p272, %p273
      %s276 = sadd.s32 %s275, 1
      %p279 = scmp.eq.s32.totalorder %s25, 1
      %p280 = scmp.ne.s32.totalorder %s275, %s277
      %p281 = scmp.eq.s32.totalorder %s25, 0
      %p282 = por %p280, %p281
      %p283 = scmp.ne.s32.totalorder %s275, %s277
      %p284 = scmp.eq.s32.totalorder %s30, 1
      %p285 = por %p283, %p284
      %p286 = scmp.ne.s32.totalorder %s277, %s278
      %p287 = scmp.eq.s32.totalorder %s30, 0
      %p288 = por %p286, %p287
      %p289 = scmp.ne.s32.totalorder %s277, %s278
      %p290 = scmp.eq.s32.totalorder %s31, 1
      %p291 = por %p289, %p290
      %p293 = scmp.ne.s32.totalorder %s278, %s292
      %p294 = scmp.eq.s32.totalorder %s31, 0
      %p295 = por %p293, %p294
      %s296 = ssub.s32 %s32, %s44
      %s297 = ssub.s32 %s33, %s40
      %s298 = sor.u32 %s296, %s297
      %p299 = scmp.eq.s32.totalorder %s298, 0
      %s301 = sadd.s32 %s300, 1
      %s302 = scalar_select %p299, %s300, %s301
      %p305 = pneg %p299
      %p306 = scmp.eq.s32.totalorder %s25, 1
      %p307 = por %p305, %p306
      %p308 = scmp.ne.s32.totalorder %s300, %s303
      %p309 = scmp.eq.s32.totalorder %s25, 0
      %p310 = por %p308, %p309
      %p311 = scmp.ne.s32.totalorder %s300, %s303
      %p312 = scmp.eq.s32.totalorder %s30, 1
      %p313 = por %p311, %p312
      %p314 = scmp.ne.s32.totalorder %s303, %s304
      %p315 = scmp.eq.s32.totalorder %s30, 0
      %p316 = por %p314, %p315
      %p317 = scmp.ne.s32.totalorder %s303, %s304
      %p318 = scmp.eq.s32.totalorder %s31, 1
      %p319 = por %p317, %p318
      %p321 = scmp.ne.s32.totalorder %s304, %s320
      %p322 = scmp.eq.s32.totalorder %s31, 0
      %p323 = por %p321, %p322
      %s324 = ssub.s32 %s32, %s44
      %s325 = ssub.s32 %s33, %s40
      %s326 = sor.u32 %s324, %s325
      %p327 = scmp.eq.s32.totalorder %s326, 0
      %s329 = sadd.s32 %s328, 1
      %s330 = scalar_select %p327, %s328, %s329
      %p333 = pneg %p327
      %p334 = scmp.eq.s32.totalorder %s25, 1
      %p335 = por %p333, %p334
      %p336 = scmp.ne.s32.totalorder %s328, %s331
      %p337 = scmp.eq.s32.totalorder %s25, 0
      %p338 = por %p336, %p337
      %p339 = scmp.ne.s32.totalorder %s328, %s331
      %p340 = scmp.eq.s32.totalorder %s30, 1
      %p341 = por %p339, %p340
      %p342 = scmp.ne.s32.totalorder %s331, %s332
      %p343 = scmp.eq.s32.totalorder %s30, 0
      %p344 = por %p342, %p343
      %p345 = scmp.ne.s32.totalorder %s331, %s332
      %p346 = scmp.eq.s32.totalorder %s31, 1
      %p347 = por %p345, %p346
      %p349 = scmp.ne.s32.totalorder %s332, %s348
      %p350 = scmp.eq.s32.totalorder %s31, 0
      %p351 = por %p349, %p350
      %p352 = scmp.le.s32.totalorder 1, %s25
      %p353 = scmp.lt.s32.totalorder %s25, 3
      %p354 = pnand %p352, %p353
      %p355 = pneg %p354
      // Predicated region
      $region9: #{tpu_custom_call.1} parent=5 // pred_check
        _
      $region10: #{tpu_custom_call.1} parent=5 // pred_check_branch
        %357 = sbr.rel (%p354) target = $region12
      $region11: #{tpu_custom_call.1} parent=5 // pred_region
        %s358 = ssub.s32 %s25, 1
        // Predicated region
        $region13: #{tpu_custom_call.1} parent=11 // pred_check
          %p359 = pneg %p58
        $region14: #{tpu_custom_call.1} parent=11 // pred_check_branch
          %361 = sbr.rel (%p359) target = $region16
        $region15: #{tpu_custom_call.1} parent=11 // pred_region
          %s363 = ssub.s32 16, 16
          %364 = vsyncadd [#allocation4], %s363
          %s366 = sshll.u32 %s0, 4
          %s367 = int_to_ptr.vmem [resolvable:$true] %s366
          %369 = dma.vmem_to_smem %s367, 16, [#allocation2], [#allocation4]
        $region16: #{tpu_custom_call.1} parent=11 // pred_fallthru
          _
        // Predicated region
        $region17: #{tpu_custom_call.1} parent=11 // pred_check
          %p370 = pneg %p192
        $region18: #{tpu_custom_call.1} parent=11 // pred_check_branch
          %372 = sbr.rel (%p370) target = $region20
        $region19: #{tpu_custom_call.1} parent=11 // pred_region
          %p373 = scmp.lt.s32.totalorder %s35, 0
          %s374 = scalar_select %p373, %s35, 0
          %s375 = smul.addr %s374, 8
          %s376 = scalar_lea.vmem %s5, %s375
        $region20: #{tpu_custom_call.1} parent=11 // pred_fallthru
          _
        // Predicated region
        $region21: #{tpu_custom_call.1} parent=11 // pred_check
          %p377 = pneg %p267
        $region22: #{tpu_custom_call.1} parent=11 // pred_check_branch
          %379 = sbr.rel (%p377) target = $region24
        $region23: #{tpu_custom_call.1} parent=11 // pred_region
          _
        $region24: #{tpu_custom_call.1} parent=11 // pred_fallthru
          _
        // Predicated region
        $region25: #{tpu_custom_call.1} parent=11 // pred_check
          %p380 = pneg %p288
        $region26: #{tpu_custom_call.1} parent=11 // pred_check_branch
          %382 = sbr.rel (%p380) target = $region28
        $region27: #{tpu_custom_call.1} parent=11 // pred_region
          _
        $region28: #{tpu_custom_call.1} parent=11 // pred_fallthru
          _
      $region12: #{tpu_custom_call.1} parent=5 // pred_fallthru
        _
      %p383 = scmp.lt.s32.totalorder %s25, 2
      // Predicated region
      $region29: #{tpu_custom_call.1} parent=5 // pred_check
        %p384 = pneg %p383
      $region30: #{tpu_custom_call.1} parent=5 // pred_check_branch
        %386 = sbr.rel (%p384) target = $region32
      $region31: #{tpu_custom_call.1} parent=5 // pred_region
        // Predicated region
        $region33: #{tpu_custom_call.1} parent=31 // pred_check
          %p387 = pneg %p80
        $region34: #{tpu_custom_call.1} parent=31 // pred_check_branch
          %389 = sbr.rel (%p387) target = $region36
        $region35: #{tpu_custom_call.1} parent=31 // pred_region
          %p390 = scmp.lt.s32.totalorder %s32, 1
          %s391 = scalar_select %p390, %s32, 1
          %p392 = scmp.lt.s32.totalorder %s33, 0
          %s393 = scalar_select %p392, %s33, 0
          %s394 = sadd.s32 %s393, %s391
          %s395 = smul.addr %s394, 8
          %s396 = scalar_lea.vmem %s1, %s395
        $region36: #{tpu_custom_call.1} parent=31 // pred_fallthru
          _
        // Predicated region
        $region37: #{tpu_custom_call.1} parent=31 // pred_check
          %p397 = pneg %p106
        $region38: #{tpu_custom_call.1} parent=31 // pred_check_branch
          %399 = sbr.rel (%p397) target = $region40
        $region39: #{tpu_custom_call.1} parent=31 // pred_region
          %p400 = scmp.lt.s32.totalorder %s32, 1
          %s401 = scalar_select %p400, %s32, 1
          %s402 = scalar_lea.vmem %s2, %s401
        $region40: #{tpu_custom_call.1} parent=31 // pred_fallthru
          _
        // Predicated region
        $region41: #{tpu_custom_call.1} parent=31 // pred_check
          %p403 = pneg %p134
        $region42: #{tpu_custom_call.1} parent=31 // pred_check_branch
          %405 = sbr.rel (%p403) target = $region44
        $region43: #{tpu_custom_call.1} parent=31 // pred_region
          %p406 = scmp.lt.s32.totalorder %s32, 1
          %s407 = scalar_select %p406, %s32, 1
          %p408 = scmp.lt.s32.totalorder %s33, 0
          %s409 = scalar_select %p408, %s33, 0
          %s410 = sadd.s32 %s409, %s407
          %s411 = smul.addr %s410, 8
          %s412 = scalar_lea.vmem %s3, %s411
        $region44: #{tpu_custom_call.1} parent=31 // pred_fallthru
          _
        // Predicated region
        $region45: #{tpu_custom_call.1} parent=31 // pred_check
          %p413 = pneg %p160
        $region46: #{tpu_custom_call.1} parent=31 // pred_check_branch
          %415 = sbr.rel (%p413) target = $region48
        $region47: #{tpu_custom_call.1} parent=31 // pred_region
          %p416 = scmp.lt.s32.totalorder %s32, 1
          %s417 = scalar_select %p416, %s32, 1
          %s418 = scalar_lea.vmem %s4, %s417
        $region48: #{tpu_custom_call.1} parent=31 // pred_fallthru
          _
        // Predicated region
        $region49: #{tpu_custom_call.1} parent=31 // pred_check
          %p419 = pneg %p214
        $region50: #{tpu_custom_call.1} parent=31 // pred_check_branch
          %421 = sbr.rel (%p419) target = $region52
        $region51: #{tpu_custom_call.1} parent=31 // pred_region
          %p422 = scmp.lt.s32.totalorder %s32, 1
          %s423 = scalar_select %p422, %s32, 1
          %p424 = scmp.lt.s32.totalorder %s33, 0
          %s425 = scalar_select %p424, %s33, 0
          %s426 = sadd.s32 %s425, %s423
          %s427 = smul.addr %s426, 8
          %s428 = scalar_lea.vmem %s6, %s427
        $region52: #{tpu_custom_call.1} parent=31 // pred_fallthru
          _
        // Predicated region
        $region53: #{tpu_custom_call.1} parent=31 // pred_check
          %p429 = pneg %p240
        $region54: #{tpu_custom_call.1} parent=31 // pred_check_branch
          %431 = sbr.rel (%p429) target = $region56
        $region55: #{tpu_custom_call.1} parent=31 // pred_region
          %p432 = scmp.lt.s32.totalorder %s32, 1
          %s433 = scalar_select %p432, %s32, 1
          %s434 = smul.addr %s433, 4
          %s435 = scalar_lea.vmem %s7, %s434
        $region56: #{tpu_custom_call.1} parent=31 // pred_fallthru
          _
      $region32: #{tpu_custom_call.1} parent=5 // pred_fallthru
        _
      %p436 = scmp.le.s32.totalorder 1, %s25
      %p437 = scmp.lt.s32.totalorder %s25, 3
      %p438 = pnand %p436, %p437
      %p439 = pneg %p438
      // Predicated region
      $region57: #{tpu_custom_call.1} parent=5 // pred_check
        _
      $region58: #{tpu_custom_call.1} parent=5 // pred_check_branch
        %441 = sbr.rel (%p438) target = $region60
      $region59: #{tpu_custom_call.1} parent=5 // pred_region
        %s442 = ssub.s32 %s25, 1
        // Predicated region
        $region61: #{tpu_custom_call.1} parent=59 // pred_check
          %p443 = pneg %p58
        $region62: #{tpu_custom_call.1} parent=59 // pred_check_branch
          %445 = sbr.rel (%p443) target = $region64
        $region63: #{tpu_custom_call.1} parent=59 // pred_region
          %446 = dma.done [#allocation4], 16
        $region64: #{tpu_custom_call.1} parent=59 // pred_fallthru
          _
        %447 = sfence
        %p448 = pneg %p58
        %p449 = pneg %p55
        %p450 = scmp.lt.s32.totalorder %s34, 1
        %s451 = scalar_select %p450, %s34, 1
        %p452 = scmp.lt.s32.totalorder %s35, 0
        %s453 = scalar_select %p452, %s35, 0
        %s454 = sadd.s32 %s453, %s451
        %s455 = smul.addr %s454, 8
        %s456 = scalar_lea.vmem %s1, %s455
        %p457 = pneg %p86
        %p458 = pneg %p83
        %p459 = scmp.lt.s32.totalorder %s34, 1
        %s460 = scalar_select %p459, %s34, 1
        %s461 = scalar_lea.vmem %s2, %s460
        %p462 = pneg %p112
        %p463 = pneg %p109
        %p464 = scmp.lt.s32.totalorder %s34, 1
        %s465 = scalar_select %p464, %s34, 1
        %p466 = scmp.lt.s32.totalorder %s35, 0
        %s467 = scalar_select %p466, %s35, 0
        %s468 = sadd.s32 %s467, %s465
        %s469 = smul.addr %s468, 8
        %s470 = scalar_lea.vmem %s3, %s469
        %p471 = pneg %p140
        %p472 = pneg %p137
        %p473 = scmp.lt.s32.totalorder %s34, 1
        %s474 = scalar_select %p473, %s34, 1
        %s475 = scalar_lea.vmem %s4, %s474
        %p476 = pneg %p166
        %p477 = pneg %p163
        %p478 = scmp.lt.s32.totalorder %s35, 0
        %s479 = scalar_select %p478, %s35, 0
        %s480 = smul.addr %s479, 8
        %s481 = scalar_lea.vmem %s5, %s480
        %p482 = pneg %p192
        %p483 = pneg %p189
        %p484 = scmp.lt.s32.totalorder %s34, 1
        %s485 = scalar_select %p484, %s34, 1
        %p486 = scmp.lt.s32.totalorder %s35, 0
        %s487 = scalar_select %p486, %s35, 0
        %s488 = sadd.s32 %s487, %s485
        %s489 = smul.addr %s488, 8
        %s490 = scalar_lea.vmem %s6, %s489
        %p491 = pneg %p220
        %p492 = pneg %p217
        %p493 = scmp.lt.s32.totalorder %s34, 1
        %s494 = scalar_select %p493, %s34, 1
        %s495 = smul.addr %s494, 4
        %s496 = scalar_lea.vmem %s7, %s495
        %p497 = pneg %p246
        %p498 = pneg %p243
        %p499 = pneg %p267
        %p500 = pneg %p264
        %p501 = pneg %p288
        %p502 = pneg %p285
        %p503 = pneg %p316
        %p504 = pneg %p313
        %s505 = sand.u32 %s303, 1
        %s506 = scalar_lea.sflag [#allocation3], %s505
        %s507 = sand.u32 %s303, 1
        %s508 = smul.addr %s507, 8
        %s509 = scalar_lea.vmem [#allocation5], %s508
        %p510 = pneg %p344
        %p511 = pneg %p341
        %s512 = sand.u32 %s331, 1
        %s513 = scalar_lea.sflag [#allocation7], %s512
        %s514 = sand.u32 %s331, 1
        %s515 = smul.addr %s514, 8
        %s516 = scalar_lea.vmem [#allocation6], %s515
        %p517 = scmp.lt.s32.totalorder %s34, 1
        %s518 = scalar_select %p517, %s34, 1
        %p519 = scmp.lt.s32.totalorder %s35, 0
        %s520 = scalar_select %p519, %s35, 0
        %s521 = sadd.s32 %s520, %s518
        %s522 = smul.addr %s521, 8
        %s523 = scalar_lea.vmem %s1, %s522
        %p524 = scmp.lt.s32.totalorder %s34, 1
        %s525 = scalar_select %p524, %s34, 1
        %s526 = scalar_lea.vmem %s2, %s525
        %p527 = scmp.lt.s32.totalorder %s34, 1
        %s528 = scalar_select %p527, %s34, 1
        %p529 = scmp.lt.s32.totalorder %s35, 0
        %s530 = scalar_select %p529, %s35, 0
        %s531 = sadd.s32 %s530, %s528
        %s532 = smul.addr %s531, 8
        %s533 = scalar_lea.vmem %s3, %s532
        %p534 = scmp.lt.s32.totalorder %s34, 1
        %s535 = scalar_select %p534, %s34, 1
        %s536 = scalar_lea.vmem %s4, %s535
        %p537 = scmp.lt.s32.totalorder %s35, 0
        %s538 = scalar_select %p537, %s35, 0
        %s539 = smul.addr %s538, 8
        %s540 = scalar_lea.vmem %s5, %s539
        %p541 = scmp.lt.s32.totalorder %s34, 1
        %s542 = scalar_select %p541, %s34, 1
        %p543 = scmp.lt.s32.totalorder %s35, 0
        %s544 = scalar_select %p543, %s35, 0
        %s545 = sadd.s32 %s544, %s542
        %s546 = smul.addr %s545, 8
        %s547 = scalar_lea.vmem %s6, %s546
        %p548 = scmp.lt.s32.totalorder %s34, 1
        %s549 = scalar_select %p548, %s34, 1
        %s550 = smul.addr %s549, 4
        %s551 = scalar_lea.vmem %s7, %s550
        %v552 = vld [vmem:[%s523] sm:$0xff]
        %v553 = vld [vmem:[%s526] sm:$0x1]
        %v554 = vld [vmem:[%s533] sm:$0xff]
        %v555 = vld [vmem:[%s536] sm:$0x1]
        %v556 = vld [vmem:[%s540] sm:$0xff]
        %v557 = vld [vmem:[%s547] sm:$0xff]
        %v558 = vld [vmem:[%s551] sm:$0xf]
        %v559 = vld [vmem:[%s8] sm:$0x1]
        %v560 = vld [vmem:[%s9] sm:$0x1]
        %s561 = sld [smem:[#allocation2]]
        %s562 = sld [smem:[#allocation2 + $0x1]]
        %s563 = sld [smem:[#allocation2 + $0x2]]
        %s564 = sld [smem:[#allocation2 + $0x3]]
        %s565 = sld [smem:[#allocation2 + $0x4]]
        %s566 = sld [smem:[#allocation2 + $0x5]]
        %s567 = sld [smem:[#allocation2 + $0x6]]
        %s568 = sld [smem:[#allocation2 + $0x7]]
        %v569 = vstv %s561
        %v570 = vmul.f32 %v569, %v552
        %v571 = vstv %s562
        %v572 = vmul.f32 %v571, %v553
        %574 = vset.pattern.permute.xlu0 0
        %575 = vperm.xlu0 %574, %v570
        %v576 = vpop.permute.xlu0 %575
        %v579 = vlaneseq
        %v580 = vshrl.u32 %v579, 7
        %v581 = vsub.s32 0, %v580
        %v582 = vrot.slane %v572, %v581
        %v584 = vadd.f32 %v576, %v582
        %vm585 = vcmp.gt.f32.partialorder %v584, 0.0
        %v586 = vmul.f32 %v584, 0.04
        %v587 = vsel %vm585, %v584, %v586
        %v588 = vstv %s563
        %v589 = vmul.f32 %v588, %v554
        %v590 = vstv %s564
        %v591 = vmul.f32 %v590, %v555
        %593 = vset.pattern.permute.xlu0 0
        %594 = vperm.xlu0 %593, %v589
        %v595 = vpop.permute.xlu0 %594
        %v598 = vlaneseq
        %v599 = vshrl.u32 %v598, 7
        %v600 = vsub.s32 0, %v599
        %v601 = vrot.slane %v591, %v600
        %v603 = vadd.f32 %v595, %v601
        %vm604 = vcmp.gt.f32.partialorder %v603, 0.0
        %v605 = vmul.f32 %v603, 0.04
        %v606 = vsel %vm604, %v603, %v605
        %vm607 = vcmp.gt.f32.partialorder %v556, 0.0
        %v608 = vadd.f32 %v587, %v606
        %v609 = vsel %vm607, %v608, -1.8e+16
        %vm610 = vcmp.gt.f32.partialorder %v609, 0.0
        %v611 = vsel %vm610, %v609, -9e+15
        %vm612 = vcmask 64512
        %v613 = vsel %vm612, %v611, -inf
        %614 = vmax.xlane.f32.xlu0 %v613
        %v615 = vpop.xlane.xlu0 %614
        %v616 = vsub.f32 %v611, %v615
        %v617 = vmul.f32 %v616, 1.442695
        %v618 = vpow.pop %v617
        %v619 = vsel %vm612, %v618, 0.0
        %620 = vadd.xlane.f32.xlu0 %v619
        %v621 = vpop.xlane.xlu0 %620
        %v622 = vrcp.pop %v621
        %v623 = vmul.f32 1.0, %v622
        %v624 = vmul.f32 %v618, %v623
        %v626 = vlaneseq
        %v627 = vshrl.u32 %v626, 7
        %v628 = vsub.s32 0, %v627
        %v629 = vrot.slane %v553, %v628
        %v631 = vmul.f32 %v624, %v629
        %v632 = vsel %vm612, %v631, 0.0
        %633 = vadd.xlane.f32.xlu0 %v632
        %v634 = vpop.xlane.xlu0 %633
        %v636 = vlaneseq
        %v637 = vshrl.u32 %v636, 7
        %v638 = vsub.s32 0, %v637
        %v639 = vrot.slane %v559, %v638
        %v641 = vmul.f32 %v634, %v639
        %vm642 = vcmp.gt.f32.partialorder %v641, 0.0
        %v643 = vmul.f32 %v641, 1.442695
        %v644 = vpow.pop %v643
        %v645 = vsub.f32 %v644, 1.0
        %v646 = vsel %vm642, %v641, %v645
        %647 = vst.msk [vmem:[%s509] sm:$0xff] %vm612, %v646
        %v648 = vstv %s565
        %v649 = vmul.f32 %v648, %v552
        %v650 = vstv %s567
        %v651 = vmul.f32 %v650, %v553
        %653 = vset.pattern.permute.xlu0 0
        %654 = vperm.xlu0 %653, %v649
        %v655 = vpop.permute.xlu0 %654
        %v658 = vlaneseq
        %v659 = vshrl.u32 %v658, 7
        %v660 = vsub.s32 0, %v659
        %v661 = vrot.slane %v651, %v660
        %v663 = vadd.f32 %v655, %v661
        %v664 = vstv %s566
        %v665 = vmul.f32 %v664, %v552
        %v666 = vstv %s568
        %v667 = vmul.f32 %v666, %v553
        %669 = vset.pattern.permute.xlu0 0
        %670 = vperm.xlu0 %669, %v665
        %v671 = vpop.permute.xlu0 %670
        %v674 = vlaneseq
        %v675 = vshrl.u32 %v674, 7
        %v676 = vsub.s32 0, %v675
        %v677 = vrot.slane %v667, %v676
        %v679 = vadd.f32 %v671, %v677
        %681 = vset.pattern.permute.xlu0 0
        %682 = vperm.xlu0 %681, %v557
        %v683 = vpop.permute.xlu0 %682
        %v685 = vmul.f32 %v663, %v683
        %v686 = vlaneseq
        %v687 = vshrl.u32 %v686, 7
        %v688 = vsub.s32 0, %v687
        %v689 = vrot.slane %v558, %v688
        %v690 = vmul.f32 %v679, %v689
        %v691 = vadd.f32 %v685, %v690
        %vm692 = vcmp.gt.f32.partialorder %v691, 0.0
        %v693 = vsel %vm692, %v691, -9e+15
        %694 = vset.pattern.permute.xlu0 1
        %695 = vperm.xlu0 %694, %v557
        %v696 = vpop.permute.xlu0 %695
        %v698 = vmul.f32 %v663, %v696
        %v699 = vlaneseq
        %v700 = vshrl.u32 %v699, 7
        %v701 = vsub.s32 1, %v700
        %v702 = vrot.slane %v558, %v701
        %v703 = vmul.f32 %v679, %v702
        %v704 = vadd.f32 %v698, %v703
        %vm705 = vcmp.gt.f32.partialorder %v704, 0.0
        %v706 = vsel %vm705, %v704, -9e+15
        %v707 = vmax.f32 %v693, %v706
        %708 = vset.pattern.permute.xlu0 2
        %709 = vperm.xlu0 %708, %v557
        %v710 = vpop.permute.xlu0 %709
        %v712 = vmul.f32 %v663, %v710
        %v713 = vlaneseq
        %v714 = vshrl.u32 %v713, 7
        %v715 = vsub.s32 2, %v714
        %v716 = vrot.slane %v558, %v715
        %v717 = vmul.f32 %v679, %v716
        %v718 = vadd.f32 %v712, %v717
        %vm719 = vcmp.gt.f32.partialorder %v718, 0.0
        %v720 = vsel %vm719, %v718, -9e+15
        %v721 = vmax.f32 %v707, %v720
        %722 = vset.pattern.permute.xlu0 3
        %723 = vperm.xlu0 %722, %v557
        %v724 = vpop.permute.xlu0 %723
        %v726 = vmul.f32 %v663, %v724
        %v727 = vlaneseq
        %v728 = vshrl.u32 %v727, 7
        %v729 = vsub.s32 3, %v728
        %v730 = vrot.slane %v558, %v729
        %v731 = vmul.f32 %v679, %v730
        %v732 = vadd.f32 %v726, %v731
        %vm733 = vcmp.gt.f32.partialorder %v732, 0.0
        %v734 = vsel %vm733, %v732, -9e+15
        %v735 = vmax.f32 %v721, %v734
        %v736 = vsub.f32 %v693, %v735
        %v737 = vmul.f32 %v736, 1.442695
        %v738 = vpow.pop %v737
        %v739 = vadd.f32 %v738, 0.0
        %v740 = vmul.f32 %v738, %v683
        %v741 = vadd.f32 %v740, 0.0
        %v742 = vsub.f32 %v706, %v735
        %v743 = vmul.f32 %v742, 1.442695
        %v744 = vpow.pop %v743
        %v745 = vadd.f32 %v739, %v744
        %v746 = vmul.f32 %v744, %v696
        %v747 = vadd.f32 %v741, %v746
        %v748 = vsub.f32 %v720, %v735
        %v749 = vmul.f32 %v748, 1.442695
        %v750 = vpow.pop %v749
        %v751 = vadd.f32 %v745, %v750
        %v752 = vmul.f32 %v750, %v710
        %v753 = vadd.f32 %v747, %v752
        %v754 = vsub.f32 %v734, %v735
        %v755 = vmul.f32 %v754, 1.442695
        %v756 = vpow.pop %v755
        %v757 = vadd.f32 %v751, %v756
        %v758 = vmul.f32 %v756, %v724
        %v759 = vadd.f32 %v753, %v758
        %v760 = vmul.f32 %v624, %v759
        %v761 = vrcp.pop %v757
        %v762 = vmul.f32 %v760, %v761
        %v763 = vsel %vm612, %v762, 0.0
        %764 = vadd.xlane.f32.xlu0 %v763
        %v765 = vpop.xlane.xlu0 %764
        %v767 = vlaneseq
        %v768 = vshrl.u32 %v767, 7
        %v769 = vsub.s32 0, %v768
        %v770 = vrot.slane %v560, %v769
        %v772 = vmul.f32 %v765, %v770
        %vm773 = vcmp.gt.f32.partialorder %v772, 0.0
        %v774 = vmul.f32 %v772, 1.442695
        %v775 = vpow.pop %v774
        %v776 = vsub.f32 %v775, 1.0
        %v777 = vsel %vm773, %v772, %v776
        %778 = vst.msk [vmem:[%s516] sm:$0xff] %vm612, %v777
        %s779 = sand.u32 %s303, 1
        %s780 = scalar_lea.sflag [#allocation3], %s779
        %s781 = sand.u32 %s303, 1
        %s782 = smul.addr %s781, 8
        %s783 = scalar_lea.vmem [#allocation5], %s782
        %s784 = sand.u32 %s331, 1
        %s785 = scalar_lea.sflag [#allocation7], %s784
        %s786 = sand.u32 %s331, 1
        %s787 = smul.addr %s786, 8
        %s788 = scalar_lea.vmem [#allocation6], %s787
        // Predicated region
        $region65: #{tpu_custom_call.1} parent=59 // pred_check
          %p789 = pneg %p313
        $region66: #{tpu_custom_call.1} parent=59 // pred_check_branch
          %791 = sbr.rel (%p789) target = $region68
        $region67: #{tpu_custom_call.1} parent=59 // pred_region
          %s793 = ssub.s32 128, 128
          %794 = vsyncadd %s780, %s793
          %s795 = sadd.s32 %s35, %s34
          %s796 = smul.addr %s795, 128
          %s797 = scalar_lea.hbm %s10, %s796
          %s799 = sshll.u32 %s783, 4
          %s800 = int_to_ptr.vmem [resolvable:$true] %s799
          %802 = dma.vmem_to_hbm [thread:$0]  %s800, 128, %s797, %s780
        $region68: #{tpu_custom_call.1} parent=59 // pred_fallthru
          _
        // Predicated region
        $region69: #{tpu_custom_call.1} parent=59 // pred_check
          %p803 = pneg %p341
        $region70: #{tpu_custom_call.1} parent=59 // pred_check_branch
          %805 = sbr.rel (%p803) target = $region72
        $region71: #{tpu_custom_call.1} parent=59 // pred_region
          %s807 = ssub.s32 128, 128
          %808 = vsyncadd %s785, %s807
          %s809 = sadd.s32 %s35, %s34
          %s810 = smul.addr %s809, 128
          %s811 = scalar_lea.hbm %s11, %s810
          %s813 = sshll.u32 %s788, 4
          %s814 = int_to_ptr.vmem [resolvable:$true] %s813
          %816 = dma.vmem_to_hbm [thread:$0]  %s814, 128, %s811, %s785
        $region72: #{tpu_custom_call.1} parent=59 // pred_fallthru
          _
      $region60: #{tpu_custom_call.1} parent=5 // pred_fallthru
        _
      %p817 = scmp.le.s32.totalorder 2, %s25
      // Predicated region
      $region73: #{tpu_custom_call.1} parent=5 // pred_check
        %p818 = pneg %p817
      $region74: #{tpu_custom_call.1} parent=5 // pred_check_branch
        %820 = sbr.rel (%p818) target = $region76
      $region75: #{tpu_custom_call.1} parent=5 // pred_region
        %s821 = ssub.s32 %s25, 2
        // Predicated region
        $region77: #{tpu_custom_call.1} parent=75 // pred_check
          %p822 = pneg %p319
        $region78: #{tpu_custom_call.1} parent=75 // pred_check_branch
          %824 = sbr.rel (%p822) target = $region80
        $region79: #{tpu_custom_call.1} parent=75 // pred_region
          %s825 = sand.u32 %s304, 1
          %s826 = scalar_lea.sflag [#allocation3], %s825
          %s827 = sand.u32 %s304, 1
          %s828 = smul.addr %s827, 8
          %s829 = scalar_lea.vmem [#allocation5], %s828
          %830 = dma.done %s826, 128
        $region80: #{tpu_custom_call.1} parent=75 // pred_fallthru
          _
        // Predicated region
        $region81: #{tpu_custom_call.1} parent=75 // pred_check
          %p831 = pneg %p347
        $region82: #{tpu_custom_call.1} parent=75 // pred_check_branch
          %833 = sbr.rel (%p831) target = $region84
        $region83: #{tpu_custom_call.1} parent=75 // pred_region
          %s834 = sand.u32 %s332, 1
          %s835 = scalar_lea.sflag [#allocation7], %s834
          %s836 = sand.u32 %s332, 1
          %s837 = smul.addr %s836, 8
          %s838 = scalar_lea.vmem [#allocation6], %s837
          %839 = dma.done %s835, 128
        $region84: #{tpu_custom_call.1} parent=75 // pred_fallthru
          _
      $region76: #{tpu_custom_call.1} parent=5 // pred_fallthru
        _
    $region6: #{tpu_custom_call.1} parent=1 // loop_footer
      %s29 = sadd.s32 1, %s25
    $region7: #{tpu_custom_call.1} parent=1 // loop_footer_branch
      %24 = sbr.rel target = $region3
    $region8: #{tpu_custom_call.1} parent=1 // loop_exit
      _
    %840 = vsyncpa [#allocation3], 1
    %s841 = scalar_lea.sflag [#allocation3], 1
    %842 = vsyncpa %s841, 1
    %843 = vsyncpa [#allocation7], 1
    %s844 = scalar_lea.sflag [#allocation7], 1
    %845 = vsyncpa %s844, 1
    %846 = vsyncpa [#allocation4], 1
    %s847 = scalar_lea.sflag [#allocation4], 1
    %848 = vsyncpa %s847, 1

</llo_original>
